<compile_context>
chip_gen: v7x
topology: tpu7x:2x2x1
jax: 0.10.0
libtpu: 0.0.40
codegen_flags: <defaults>
</compile_context>

<pallas_src>
import jax
import jax.numpy as jnp
from jax.experimental import pallas as pl
from jax.experimental.pallas import tpu as pltpu

DIM = 64
IN_FEATURES = 2 * DIM          # 128
HIDDEN = DIM                   # 64
OUT_FEATURES = 1
PACK = 2                       # batch rows packed per lane-row (128 lanes / 64 hidden)
PACKED_IN = PACK * IN_FEATURES    # 256
PACKED_HID = PACK * HIDDEN        # 128


def _round_up(x, m):
    return ((x + m - 1) // m) * m


def net2_kernel(x_ref, w1_ref, b1_ref, w2_ref, b2_ref, o_ref):
    # x_ref:  (tr, 256)   two batch rows packed per row
    # w1_ref: (256, 128)  block-diag(W1, W1)
    # b1_ref: (1, 128)    [b1, b1]
    # w2_ref: (1, 64)
    # b2_ref: (1, 1)
    # o_ref:  (tr, 2)     column c = output of packed batch row c
    x = x_ref[...]

    # Layer 1 (+ReLU): one MXU matmul computes the hidden activations of BOTH
    # packed batch rows (lanes 0:64 and 64:128) with f32 accumulation.
    h = jnp.dot(x, w1_ref[...], preferred_element_type=jnp.float32) + b1_ref[...]
    h = jnp.maximum(h, 0.0)                                   # (tr, 128)

    # Layer 2 (out_features == 1): VPU multiply + lane reduce per packed half.
    # This overlaps with the MXU work instead of issuing an N=1 matmul.
    w2 = w2_ref[...]                                          # (1, 64)
    b2 = b2_ref[...]                                          # (1, 1)
    out_even = jnp.sum(h[:, :HIDDEN] * w2, axis=-1, keepdims=True) + b2   # (tr, 1)
    out_odd = jnp.sum(h[:, HIDDEN:] * w2, axis=-1, keepdims=True) + b2    # (tr, 1)
    o_ref[...] = jnp.concatenate([out_even, out_odd], axis=-1).astype(o_ref.dtype)


def net2_forward(x, w1, b1, w2, b2, *, tb=4096):
    """Fused Linear->ReLU->Linear. x: [B, 128] -> [B, 1].

    tb is the logical batch tile (rows of X); it is kept a multiple of 16 so
    the packed tile (tb/2 rows) satisfies the (8,128) sublane/lane tiling.
    """
    B, F = x.shape
    assert F == IN_FEATURES

    # Clamp the tile for tiny batches, keep it a multiple of 2*8=16, and pad
    # the batch so the grid is exact.
    tb_eff = min(_round_up(tb, 2 * 8), _round_up(B, 2 * 8))
    b_pad = _round_up(B, tb_eff)
    if b_pad != B:
        x = jnp.pad(x, ((0, b_pad - B), (0, 0)))

    # Pack two consecutive batch rows per matrix row (contiguous reshape: free).
    x_packed = x.reshape(b_pad // PACK, PACKED_IN)

    # Block-diagonal W1 and tiled b1 so one matmul serves both packed rows.
    zeros = jnp.zeros_like(w1)
    w1_bd = jnp.concatenate(
        [jnp.concatenate([w1, zeros], axis=1),
         jnp.concatenate([zeros, w1], axis=1)], axis=0)       # (256, 128)
    b1_wide = jnp.concatenate([b1, b1], axis=1)               # (1, 128)

    tr = tb_eff // PACK
    grid = (b_pad // tb_eff,)

    out = pl.pallas_call(
        net2_kernel,
        out_shape=jax.ShapeDtypeStruct((b_pad // PACK, PACK), jnp.float32),
        grid_spec=pl.GridSpec(
            grid=grid,
            in_specs=[
                pl.BlockSpec((tr, PACKED_IN), lambda i: (i, 0)),        # packed X tile
                pl.BlockSpec((PACKED_IN, PACKED_HID), lambda i: (0, 0)),  # W1 block-diag (resident)
                pl.BlockSpec((1, PACKED_HID), lambda i: (0, 0)),        # b1 tiled
                pl.BlockSpec((1, HIDDEN), lambda i: (0, 0)),            # W2 row
                pl.BlockSpec((1, OUT_FEATURES), lambda i: (0, 0)),      # b2
            ],
            out_specs=pl.BlockSpec((tr, PACK), lambda i: (i, 0)),
        ),
        compiler_params=pltpu.CompilerParams(
            dimension_semantics=("parallel",),
        ),
    )(x_packed, w1_bd, b1_wide, w2, b2)

    # (b_pad/2, 2) row-major == (b_pad, 1) in original batch order.
    out = out.reshape(b_pad, OUT_FEATURES)
    if b_pad != B:
        out = out[:B]
    return out


def init_params(key):
    """Deterministic init mimicking PyTorch Linear default (uniform +-1/sqrt(fan_in))."""
    k1, k2, k3, k4 = jax.random.split(key, 4)
    bound1 = 1.0 / jnp.sqrt(IN_FEATURES)
    bound2 = 1.0 / jnp.sqrt(HIDDEN)
    # W1 stored as [in, out]; W2 stored as [out, in] == PyTorch lin2.weight shape (1, 64).
    w1 = jax.random.uniform(k1, (IN_FEATURES, HIDDEN), jnp.float32, -bound1, bound1)
    b1 = jax.random.uniform(k2, (1, HIDDEN), jnp.float32, -bound1, bound1)
    w2 = jax.random.uniform(k3, (1, HIDDEN), jnp.float32, -bound2, bound2)
    b2 = jax.random.uniform(k4, (1, OUT_FEATURES), jnp.float32, -bound2, bound2)
    return w1, b1, w2, b2


def net2_reference(x, w1, b1, w2, b2):
    h = jnp.maximum(x @ w1 + b1, 0.0)
    return h @ w2.T + b2


if __name__ == "__main__":
    key = jax.random.PRNGKey(0)
    kx1, kx2, kp = jax.random.split(key, 3)
    w1, b1, w2, b2 = init_params(kp)

    # Case 1: small ragged batch (exercises padding / clamped tile, single grid step).
    B1 = 37
    x1 = jax.random.normal(kx1, (B1, IN_FEATURES), jnp.float32)
    out1 = jax.block_until_ready(net2_forward(x1, w1, b1, w2, b2))
    ref1 = net2_reference(x1, w1, b1, w2, b2)
    assert out1.shape == (B1, 1), out1.shape
    assert jnp.allclose(out1, ref1, atol=2e-4, rtol=1e-4), (out1, ref1)

    # Case 2: larger batch with an explicit tile, multi-step "parallel" grid.
    B2 = 2048
    x2 = jax.random.normal(kx2, (B2, IN_FEATURES), jnp.float32)
    out2 = jax.block_until_ready(net2_forward(x2, w1, b1, w2, b2, tb=512))
    ref2 = net2_reference(x2, w1, b1, w2, b2)
    assert out2.shape == (B2, 1), out2.shape
    assert jnp.allclose(out2, ref2, atol=2e-4, rtol=1e-4), (out2, ref2)

    print("KERNEL_OK")
</pallas_src>

<mosaic_0001>
module attributes {stable_mosaic.version = 11 : i64} {
  func.func @net2_kernel(%arg0: i32, %arg1: memref<24x256xf32, #tpu.memory_space<vmem>>, %arg2: memref<256x128xf32, #tpu.memory_space<vmem>>, %arg3: memref<1x128xf32, #tpu.memory_space<vmem>>, %arg4: memref<1x64xf32, #tpu.memory_space<vmem>>, %arg5: memref<1x1xf32, #tpu.memory_space<vmem>>, %arg6: memref<24x2xf32, #tpu.memory_space<vmem>>) attributes {dimension_semantics = [#tpu.dimension_semantics<parallel>], iteration_bounds = array<i64: 1>, scalar_prefetch = 0 : i64, scratch_operands = 0 : i64, tpu.core_type = #tpu.core_type<tc>, window_params = [{transform_indices = @transform_0, window_bounds = array<i64: 24, 256>}, {pipeline_mode = #tpu.pipeline_mode<synchronous>, transform_indices = @transform_1, window_bounds = array<i64: 256, 128>}, {pipeline_mode = #tpu.pipeline_mode<synchronous>, transform_indices = @transform_2, window_bounds = array<i64: 1, 128>}, {pipeline_mode = #tpu.pipeline_mode<synchronous>, transform_indices = @transform_3, window_bounds = array<i64: 1, 64>}, {pipeline_mode = #tpu.pipeline_mode<synchronous>, transform_indices = @transform_4, window_bounds = array<i64: 1, 1>}, {transform_indices = @transform_5, window_bounds = array<i64: 24, 2>}]} {
    %c0 = arith.constant 0 : index
    %c0_0 = arith.constant 0 : index
    %0 = vector.load %arg1[%c0, %c0_0] : memref<24x256xf32, #tpu.memory_space<vmem>>, vector<24x256xf32>
    %c0_1 = arith.constant 0 : index
    %c0_2 = arith.constant 0 : index
    %1 = vector.load %arg2[%c0_1, %c0_2] : memref<256x128xf32, #tpu.memory_space<vmem>>, vector<256x128xf32>
    %cst = arith.constant dense<0.000000e+00> : vector<24x128xf32>
    %2 = tpu.matmul %0, %1, %cst {dimension_numbers = #tpu.dot_dimension_numbers<[1], [0], [0], [1], [0, 0, 1, 1], [], []>} : vector<24x256xf32>, vector<256x128xf32>, vector<24x128xf32> -> vector<24x128xf32>
    %c0_3 = arith.constant 0 : index
    %c0_4 = arith.constant 0 : index
    %3 = vector.load %arg3[%c0_3, %c0_4] : memref<1x128xf32, #tpu.memory_space<vmem>>, vector<1x128xf32>
    %4 = vector.broadcast %3 : vector<1x128xf32> to vector<24x128xf32>
    %5 = arith.addf %2, %4 : vector<24x128xf32>
    %cst_5 = arith.constant 0.000000e+00 : f32
    %6 = vector.broadcast %cst_5 : f32 to vector<24x128xf32>
    %7 = arith.maximumf %5, %6 : vector<24x128xf32>
    %c0_6 = arith.constant 0 : index
    %c0_7 = arith.constant 0 : index
    %8 = vector.load %arg4[%c0_6, %c0_7] : memref<1x64xf32, #tpu.memory_space<vmem>>, vector<1x64xf32>
    %c0_8 = arith.constant 0 : index
    %c0_9 = arith.constant 0 : index
    %9 = vector.load %arg5[%c0_8, %c0_9] : memref<1x1xf32, #tpu.memory_space<vmem>>, vector<1x1xf32>
    %10 = vector.extract_strided_slice %7 {offsets = [0, 0], sizes = [24, 64], strides = [1, 1]} : vector<24x128xf32> to vector<24x64xf32>
    %11 = vector.broadcast %8 : vector<1x64xf32> to vector<24x64xf32>
    %12 = arith.mulf %10, %11 : vector<24x64xf32>
    %cst_10 = arith.constant dense<0.000000e+00> : vector<24xf32>
    %13 = vector.multi_reduction <add>, %12, %cst_10 [1] : vector<24x64xf32> to vector<24xf32>
    %14 = vector.shape_cast %13 : vector<24xf32> to vector<24x1xf32>
    %15 = vector.broadcast %9 : vector<1x1xf32> to vector<24x1xf32>
    %16 = arith.addf %14, %15 : vector<24x1xf32>
    %17 = vector.extract_strided_slice %7 {offsets = [0, 64], sizes = [24, 64], strides = [1, 1]} : vector<24x128xf32> to vector<24x64xf32>
    %18 = vector.broadcast %8 : vector<1x64xf32> to vector<24x64xf32>
    %19 = arith.mulf %17, %18 : vector<24x64xf32>
    %cst_11 = arith.constant dense<0.000000e+00> : vector<24xf32>
    %20 = vector.multi_reduction <add>, %19, %cst_11 [1] : vector<24x64xf32> to vector<24xf32>
    %21 = vector.shape_cast %20 : vector<24xf32> to vector<24x1xf32>
    %22 = vector.broadcast %9 : vector<1x1xf32> to vector<24x1xf32>
    %23 = arith.addf %21, %22 : vector<24x1xf32>
    %24 = tpu.concatenate %16, %23 in 1 : vector<24x1xf32>, vector<24x1xf32> -> vector<24x2xf32>
    %c0_12 = arith.constant 0 : index
    %c0_13 = arith.constant 0 : index
    %25 = vector.load %arg6[%c0_12, %c0_13] : memref<24x2xf32, #tpu.memory_space<vmem>>, vector<24x2xf32>
    tpu.vector_store %arg6[%c0_12, %c0_13], %24 {strides = array<i32>} : memref<24x2xf32, #tpu.memory_space<vmem>>, vector<24x2xf32>,
    return
  }
  func.func @transform_0(%arg0: i32) -> (i32, i32) {
    %c0_i32 = arith.constant 0 : i32
    %c0_i32_0 = arith.constant 0 : i32
    return %arg0, %c0_i32 : i32, i32
  }
  func.func @transform_1(%arg0: i32) -> (i32, i32) {
    %c0_i32 = arith.constant 0 : i32
    %c0_i32_0 = arith.constant 0 : i32
    %c0_i32_1 = arith.constant 0 : i32
    return %c0_i32, %c0_i32_0 : i32, i32
  }
  func.func @transform_2(%arg0: i32) -> (i32, i32) {
    %c0_i32 = arith.constant 0 : i32
    %c0_i32_0 = arith.constant 0 : i32
    %c0_i32_1 = arith.constant 0 : i32
    return %c0_i32, %c0_i32_0 : i32, i32
  }
  func.func @transform_3(%arg0: i32) -> (i32, i32) {
    %c0_i32 = arith.constant 0 : i32
    %c0_i32_0 = arith.constant 0 : i32
    %c0_i32_1 = arith.constant 0 : i32
    return %c0_i32, %c0_i32_0 : i32, i32
  }
  func.func @transform_4(%arg0: i32) -> (i32, i32) {
    %c0_i32 = arith.constant 0 : i32
    %c0_i32_0 = arith.constant 0 : i32
    %c0_i32_1 = arith.constant 0 : i32
    return %c0_i32, %c0_i32_0 : i32, i32
  }
  func.func @transform_5(%arg0: i32) -> (i32, i32) {
    %c0_i32 = arith.constant 0 : i32
    %c0_i32_0 = arith.constant 0 : i32
    return %arg0, %c0_i32 : i32, i32
  }
}

</mosaic_0001>

<llo_original>
// kernel: tpu_custom_call.1
$region0: #{tpu_custom_call.1}
  #allocation0 [shape = 'u32[]', space=smem, size = 0x4, offset = 0x4, fixed_abs, tag = 'smem constant byte address 0x4 - core index']
  #allocation1 [shape = 'u32[144,128]{1,0:T(1,128)}', space=vmem, size = 0x12000, scoped, tag = 'internal scratch']
  #allocation2 [shape = 'f32[1,1]{1,0:T(1,128)S(1)}', space=vmem, size = 0x200, scoped, tag = 'scoped memory for tpu_custom_call.1']
  %s0 = inlined_call_operand.hbm [shape: f32[24,256], index: 0, kind: input, shape index: {}]
  %s1 = inlined_call_operand.hbm [shape: f32[256,128], index: 1, kind: input, shape index: {}]
  %s2 = inlined_call_operand.vmem [shape: f32[1,128], index: 2, kind: input, shape index: {}]
  %s3 = inlined_call_operand.vmem [shape: f32[1,64], index: 3, kind: input, shape index: {}]
  %s4 = inlined_call_operand.<no memory space> [shape: f32[1,1], index: 4, kind: input, shape index: {}]
  %s5 = inlined_call_operand.vmem [shape: f32[24,2], index: 5, kind: output, shape index: {}]
  %s6 = sld [smem:[#allocation0]]
  $region38: #{tpu_custom_call.1} parent=0
    _
  %s8 = ssub.s32 1, %s6
  %s9 = scalar_select 0, %s8, %s6
  %v10 = vstv %s4
  %11 = vst [vmem:[#allocation2] sm:$0x1] %v10
  $region1: #{tpu_custom_call.1} parent=0
    #allocation3 [shape = 'u8[24576]{0}', space=vmem, size = 0x6000, scoped, tag = 'input window, operand 0, single buffered']
    #allocation4 [shape = 's32[1]{0}', space=sflag, size = 0x4, scoped, tag = 'scoped memory for tpu_custom_call.1']
    #allocation5 [shape = 'u8[131072]{0}', space=vmem, size = 0x20000, scoped, tag = 'input window, operand 1, single buffered']
    #allocation6 [shape = 's32[1]{0}', space=sflag, size = 0x4, scoped, tag = 'scoped memory for tpu_custom_call.1']
    %12 = vsyncpa [#allocation4], 0
    %13 = vsyncpa [#allocation6], 0
    // Predicated region
    $region2: #{tpu_custom_call.1} parent=1 // pred_check
      _
    $region3: #{tpu_custom_call.1} parent=1 // pred_check_branch
      %15 = sbr.rel (0) target = $region5
    $region4: #{tpu_custom_call.1} parent=1 // pred_region
      %s17 = ssub.s32 768, 768
      %18 = vsyncadd [#allocation4], %s17
      %s19 = sshll.u32 [#allocation3], 4
      %s20 = int_to_ptr.vmem [resolvable:$true] %s19
      %25 = dma.hbm_to_vmem [thread:$0]  %s0, 768, %s20, [#allocation4], 256, 256, 16
    $region5: #{tpu_custom_call.1} parent=1 // pred_fallthru
      _
    // Predicated region
    $region6: #{tpu_custom_call.1} parent=1 // pred_check
      _
    $region7: #{tpu_custom_call.1} parent=1 // pred_check_branch
      %27 = sbr.rel (0) target = $region9
    $region8: #{tpu_custom_call.1} parent=1 // pred_region
      %s29 = ssub.s32 4096, 4096
      %30 = vsyncadd [#allocation6], %s29
      %s31 = sshll.u32 [#allocation5], 4
      %s32 = int_to_ptr.vmem [resolvable:$true] %s31
      %37 = dma.hbm_to_vmem [thread:$0]  %s1, 4096, %s32, [#allocation6], 128, 128, 8
    $region9: #{tpu_custom_call.1} parent=1 // pred_fallthru
      _
    // Predicated region
    $region10: #{tpu_custom_call.1} parent=1 // pred_check
      _
    $region11: #{tpu_custom_call.1} parent=1 // pred_check_branch
      %39 = sbr.rel (0) target = $region13
    $region12: #{tpu_custom_call.1} parent=1 // pred_region
      _
    $region13: #{tpu_custom_call.1} parent=1 // pred_fallthru
      _
    // Predicated region
    $region14: #{tpu_custom_call.1} parent=1 // pred_check
      _
    $region15: #{tpu_custom_call.1} parent=1 // pred_check_branch
      %41 = sbr.rel (0) target = $region17
    $region16: #{tpu_custom_call.1} parent=1 // pred_region
      _
    $region17: #{tpu_custom_call.1} parent=1 // pred_fallthru
      _
    // Predicated region
    $region18: #{tpu_custom_call.1} parent=1 // pred_check
      _
    $region19: #{tpu_custom_call.1} parent=1 // pred_check_branch
      %43 = sbr.rel (0) target = $region21
    $region20: #{tpu_custom_call.1} parent=1 // pred_region
      _
    $region21: #{tpu_custom_call.1} parent=1 // pred_fallthru
      _
    // Predicated region
    $region22: #{tpu_custom_call.1} parent=1 // pred_check
      _
    $region23: #{tpu_custom_call.1} parent=1 // pred_check_branch
      %45 = sbr.rel (0) target = $region25
    $region24: #{tpu_custom_call.1} parent=1 // pred_region
      %46 = dma.done [#allocation4], 768
    $region25: #{tpu_custom_call.1} parent=1 // pred_fallthru
      _
    // Predicated region
    $region26: #{tpu_custom_call.1} parent=1 // pred_check
      _
    $region27: #{tpu_custom_call.1} parent=1 // pred_check_branch
      %48 = sbr.rel (0) target = $region29
    $region28: #{tpu_custom_call.1} parent=1 // pred_region
      %49 = dma.done [#allocation6], 4096
    $region29: #{tpu_custom_call.1} parent=1 // pred_fallthru
      _
    %v50 = vld [vmem:[#allocation3] sm:$0xff]
    %v51 = vld [vmem:[#allocation3 + $0x8] sm:$0xff]
    %v52 = vld [vmem:[#allocation3 + $0x10] sm:$0xff]
    %v53 = vld [vmem:[#allocation3 + $0x18] sm:$0xff]
    %v54 = vld [vmem:[#allocation3 + $0x20] sm:$0xff]
    %v55 = vld [vmem:[#allocation3 + $0x28] sm:$0xff]
    %v56 = vld [vmem:[#allocation5] sm:$0xff]
    %v57 = vld [vmem:[#allocation5 + $0x8] sm:$0xff]
    %v58 = vld [vmem:[#allocation5 + $0x10] sm:$0xff]
    %v59 = vld [vmem:[#allocation5 + $0x18] sm:$0xff]
    %v60 = vld [vmem:[#allocation5 + $0x20] sm:$0xff]
    %v61 = vld [vmem:[#allocation5 + $0x28] sm:$0xff]
    %v62 = vld [vmem:[#allocation5 + $0x30] sm:$0xff]
    %v63 = vld [vmem:[#allocation5 + $0x38] sm:$0xff]
    %v64 = vld [vmem:[#allocation5 + $0x40] sm:$0xff]
    %v65 = vld [vmem:[#allocation5 + $0x48] sm:$0xff]
    %v66 = vld [vmem:[#allocation5 + $0x50] sm:$0xff]
    %v67 = vld [vmem:[#allocation5 + $0x58] sm:$0xff]
    %v68 = vld [vmem:[#allocation5 + $0x60] sm:$0xff]
    %v69 = vld [vmem:[#allocation5 + $0x68] sm:$0xff]
    %v70 = vld [vmem:[#allocation5 + $0x70] sm:$0xff]
    %v71 = vld [vmem:[#allocation5 + $0x78] sm:$0xff]
    %v72 = vld [vmem:[#allocation5 + $0x80] sm:$0xff]
    %v73 = vld [vmem:[#allocation5 + $0x88] sm:$0xff]
    %v74 = vld [vmem:[#allocation5 + $0x90] sm:$0xff]
    %v75 = vld [vmem:[#allocation5 + $0x98] sm:$0xff]
    %v76 = vld [vmem:[#allocation5 + $0xa0] sm:$0xff]
    %v77 = vld [vmem:[#allocation5 + $0xa8] sm:$0xff]
    %v78 = vld [vmem:[#allocation5 + $0xb0] sm:$0xff]
    %v79 = vld [vmem:[#allocation5 + $0xb8] sm:$0xff]
    %v80 = vld [vmem:[#allocation5 + $0xc0] sm:$0xff]
    %v81 = vld [vmem:[#allocation5 + $0xc8] sm:$0xff]
    %v82 = vld [vmem:[#allocation5 + $0xd0] sm:$0xff]
    %v83 = vld [vmem:[#allocation5 + $0xd8] sm:$0xff]
    %v84 = vld [vmem:[#allocation5 + $0xe0] sm:$0xff]
    %v85 = vld [vmem:[#allocation5 + $0xe8] sm:$0xff]
    %v86 = vld [vmem:[#allocation5 + $0xf0] sm:$0xff]
    %v87 = vld [vmem:[#allocation5 + $0xf8] sm:$0xff]
    %v88 = vld [vmem:[%s2] sm:$0x1]
    %v90 = vlaneseq
    %v91 = vshrl.u32 %v90, 7
    %v92 = vsub.s32 0, %v91
    %v93 = vrot.slane %v88, %v92
    %95 = vmatprep.subr.mxu0 0.0
    %96 = vmatpush1.msra.mxu0 %v56
    %97 = vmatprep.subr.mxu0 0.0
    %98 = vmatpush1.msra.mxu0 %v57
    %99 = vmatprep.subr.mxu0 0.0
    %100 = vmatpush1.msra.mxu0 %v58
    %101 = vmatprep.subr.mxu0 0.0
    %102 = vmatpush1.msra.mxu0 %v59
    %103 = vmatprep.subr.mxu0 0.0
    %104 = vmatpush1.msra.mxu0 %v60
    %105 = vmatprep.subr.mxu0 0.0
    %106 = vmatpush1.msra.mxu0 %v61
    %107 = vmatprep.subr.mxu0 0.0
    %108 = vmatpush1.msra.mxu0 %v62
    %109 = vmatprep.subr.mxu0 0.0
    %110 = vmatpush1.msra.mxu0 %v63
    %111 = vmatprep.subr.mxu0 0.0
    %112 = vmatpush1.msra.mxu0 %v64
    %113 = vmatprep.subr.mxu0 0.0
    %114 = vmatpush1.msra.mxu0 %v65
    %115 = vmatprep.subr.mxu0 0.0
    %116 = vmatpush1.msra.mxu0 %v66
    %117 = vmatprep.subr.mxu0 0.0
    %118 = vmatpush1.msra.mxu0 %v67
    %119 = vmatprep.subr.mxu0 0.0
    %120 = vmatpush1.msra.mxu0 %v68
    %121 = vmatprep.subr.mxu0 0.0
    %122 = vmatpush1.msra.mxu0 %v69
    %123 = vmatprep.subr.mxu0 0.0
    %124 = vmatpush1.msra.mxu0 %v70
    %125 = vmatprep.subr.mxu0 0.0
    %126 = vmatpush1.msra.mxu0 %v71
    %127 = vmatprep.subr.mxu0 0.0
    %128 = vmatpush1.msra.mxu0 %v72
    %129 = vmatprep.subr.mxu0 0.0
    %130 = vmatpush1.msra.mxu0 %v73
    %131 = vmatprep.subr.mxu0 0.0
    %132 = vmatpush1.msra.mxu0 %v74
    %133 = vmatprep.subr.mxu0 0.0
    %134 = vmatpush1.msra.mxu0 %v75
    %135 = vmatprep.subr.mxu0 0.0
    %136 = vmatpush1.msra.mxu0 %v76
    %137 = vmatprep.subr.mxu0 0.0
    %138 = vmatpush1.msra.mxu0 %v77
    %139 = vmatprep.subr.mxu0 0.0
    %140 = vmatpush1.msra.mxu0 %v78
    %141 = vmatprep.subr.mxu0 0.0
    %142 = vmatpush1.msra.mxu0 %v79
    %143 = vmatprep.subr.mxu0 0.0
    %144 = vmatpush1.msra.mxu0 %v80
    %145 = vmatprep.subr.mxu0 0.0
    %146 = vmatpush1.msra.mxu0 %v81
    %147 = vmatprep.subr.mxu0 0.0
    %148 = vmatpush1.msra.mxu0 %v82
    %149 = vmatprep.subr.mxu0 0.0
    %150 = vmatpush1.msra.mxu0 %v83
    %151 = vmatprep.subr.mxu0 0.0
    %152 = vmatpush1.msra.mxu0 %v84
    %153 = vmatprep.subr.mxu0 0.0
    %154 = vmatpush1.msra.mxu0 %v85
    %155 = vmatprep.subr.mxu0 0.0
    %156 = vmatpush1.msra.mxu0 %v86
    %157 = vmatprep.subr.mxu0 0.0
    %158 = vmatpush1.msra.mxu0 %v87
    %159 = vmatprep.mubr.f32.mxu0 %v51
    %160 = vmatmul.mubr.f32.gmra.mrb[0].mxu0 %v50
    %v161 = vpop.f32.mrb[0].mxu0
    %v162 = vadd.f32 %v93, %v161
    %v163 = vpop.f32.mrb[0].mxu0
    %164 = vmatprep.mubr.f32.mxu0 %v53
    %165 = vmatmul.mubr.f32.gmra.mrb[0].mxu0 %v52
    %v166 = vpop.f32.mrb[0].mxu0
    %v167 = vadd.f32 %v93, %v166
    %v168 = vpop.f32.mrb[0].mxu0
    %169 = vmatprep.mubr.f32.mxu0 %v55
    %170 = vmatmul.mubr.f32.gmra.mrb[0].mxu0 %v54
    %v171 = vpop.f32.mrb[0].mxu0
    %v172 = vadd.f32 %v93, %v171
    %v173 = vpop.f32.mrb[0].mxu0
    %174 = vdwg.mxu0
    %v175 = vmax.f32 %v162, 0.0
    %v176 = vmax.f32 %v167, 0.0
    %v177 = vmax.f32 %v172, 0.0
    %v178 = vld [vmem:[%s3] sm:$0x1]
    %v179 = vld [vmem:[#allocation2] sm:$0x1]
    %v181 = vlaneseq
    %v182 = vshrl.u32 %v181, 7
    %v183 = vsub.s32 0, %v182
    %v184 = vrot.slane %v178, %v183
    %v186 = vmul.f32 %v175, %v184
    %v187 = vmul.f32 %v176, %v184
    %v188 = vmul.f32 %v177, %v184
    %vm189 = vcmask 523264
    %v190 = vsel %vm189, %v186, 0.0
    %191 = vadd.xlane.f32.xlu0 %v190
    %v192 = vpop.xlane.xlu0 %191
    %v193 = vsel %vm189, %v187, 0.0
    %194 = vadd.xlane.f32.xlu0 %v193
    %v195 = vpop.xlane.xlu0 %194
    %v196 = vsel %vm189, %v188, 0.0
    %197 = vadd.xlane.f32.xlu0 %v196
    %v198 = vpop.xlane.xlu0 %197
    %v200 = vlaneseq
    %v201 = vshrl.u32 %v200, 7
    %v202 = vsub.s32 0, %v201
    %v203 = vrot.slane %v179, %v202
    %v205 = vadd.f32 %v192, %v203
    %v206 = vadd.f32 %v195, %v203
    %v207 = vadd.f32 %v198, %v203
    %208 = vrot.lane.b32.xlu0 %v184, 64
    %v209 = vpop.permute.xlu0 %208
    %v211 = vmul.f32 %v175, %v209
    %v212 = vmul.f32 %v176, %v209
    %v213 = vmul.f32 %v177, %v209
    %217 = vrot.lane.b32.xlu0 %v211, 64
    %v218 = vpop.permute.xlu0 %217
    %219 = vrot.lane.b32.xlu0 %v212, 64
    %v220 = vpop.permute.xlu0 %219
    %221 = vrot.lane.b32.xlu0 %v213, 64
    %v222 = vpop.permute.xlu0 %221
    %v226 = vsel %vm189, %v218, 0.0
    %227 = vadd.xlane.f32.xlu0 %v226
    %v228 = vpop.xlane.xlu0 %227
    %v229 = vsel %vm189, %v220, 0.0
    %230 = vadd.xlane.f32.xlu0 %v229
    %v231 = vpop.xlane.xlu0 %230
    %v232 = vsel %vm189, %v222, 0.0
    %233 = vadd.xlane.f32.xlu0 %v232
    %v234 = vpop.xlane.xlu0 %233
    %v235 = vadd.f32 %v228, %v203
    %v236 = vadd.f32 %v231, %v203
    %v237 = vadd.f32 %v234, %v203
    %241 = vrot.lane.b32.xlu0 %v235, 1
    %v242 = vpop.permute.xlu0 %241
    %243 = vrot.lane.b32.xlu0 %v236, 1
    %v244 = vpop.permute.xlu0 %243
    %245 = vrot.lane.b32.xlu0 %v237, 1
    %v246 = vpop.permute.xlu0 %245
    %vm250 = vcmask 7168
    %v251 = vsel %vm250, %v205, %v242
    %v252 = vsel %vm250, %v206, %v244
    %v253 = vsel %vm250, %v207, %v246
    %vm254 = vcmask 15360
    %255 = vst.msk [vmem:[%s5] sm:$0xff] %vm254, %v251
    %256 = vst.msk [vmem:[%s5 + $0x8] sm:$0xff] %vm254, %v252
    %257 = vst.msk [vmem:[%s5 + $0x10] sm:$0xff] %vm254, %v253
    // Predicated region
    $region30: #{tpu_custom_call.1} parent=1 // pred_check
      _
    $region31: #{tpu_custom_call.1} parent=1 // pred_check_branch
      %259 = sbr.rel (0) target = $region33
    $region32: #{tpu_custom_call.1} parent=1 // pred_region
      _
    $region33: #{tpu_custom_call.1} parent=1 // pred_fallthru
      _
    // Predicated region
    $region34: #{tpu_custom_call.1} parent=1 // pred_check
      _
    $region35: #{tpu_custom_call.1} parent=1 // pred_check_branch
      %261 = sbr.rel (0) target = $region37
    $region36: #{tpu_custom_call.1} parent=1 // pred_region
      _
    $region37: #{tpu_custom_call.1} parent=1 // pred_fallthru
      _
    %262 = vsyncpa [#allocation4], 1
    %263 = vsyncpa [#allocation6], 1

</llo_original>
